<compile_context>
chip_gen: v6e
topology: v6e:2x2x1
jax: 0.10.0
libtpu: 0.0.40
codegen_flags: <defaults>
</compile_context>

<pallas_src>
import functools

import jax
import jax.numpy as jnp
from jax.experimental import pallas as pl
from jax.experimental.pallas import tpu as pltpu


def _nll_smooth_kernel(x_ref, t_ref, out_ref, *, confidence, smoothing,
                       inv_nclasses, hw_valid, hw_tile, needs_mask):
    """x_ref: (1, C, hw_tile) logits; t_ref: (1, 1, hw_tile) int32 labels;
    out_ref: (8, 128) f32, partial sum stored at [0, 0]."""
    x = x_ref[0].astype(jnp.float32)          # (C, hw) — cast in-kernel (input may be bf16)
    t = t_ref[0]                              # (1, hw) int32

    # log-sum-exp over the class (sublane) axis
    m = jnp.max(x, axis=0, keepdims=True)                               # (1, hw)
    lse = jnp.log(jnp.sum(jnp.exp(x - m), axis=0, keepdims=True))       # (1, hw)

    # x[target]: select-and-sum over the C sublanes (equivalent to one-hot gather)
    cls = jax.lax.broadcasted_iota(jnp.int32, x.shape, 0)               # (C, hw)
    x_t = jnp.sum(jnp.where(cls == t, x, 0.0), axis=0, keepdims=True)   # (1, hw)
    mean_x = jnp.sum(x, axis=0, keepdims=True) * inv_nclasses           # (1, hw)

    # conf*nll + smoothing*smooth  ==  (m + lse) - conf*x[t] - smoothing*mean_c(x)
    per_pixel = (m + lse) - confidence * x_t - smoothing * mean_x       # (1, hw)

    if needs_mask:
        # zero out contributions from padded pixels on the last (padded) blocks
        j = pl.program_id(1)
        pix = j * hw_tile + jax.lax.broadcasted_iota(jnp.int32, per_pixel.shape, 1)
        per_pixel = jnp.where(pix < hw_valid, per_pixel, 0.0)

    partial = jnp.sum(per_pixel)              # exact per-block partial (scalar)

    r = jax.lax.broadcasted_iota(jnp.int32, out_ref.shape, 0)
    c = jax.lax.broadcasted_iota(jnp.int32, out_ref.shape, 1)
    out_ref[...] = jnp.where((r == 0) & (c == 0), partial, 0.0)


def _choose_tile(hw, max_tile):
    """Pick a pixel-axis tile (multiple of 128, or the full axis) and padded axis length."""
    if hw <= max_tile:
        return hw, hw                          # one block covers the whole pixel axis
    aligned = max(128, (max_tile // 128) * 128)
    t = aligned
    while t >= 128:                            # prefer an exact divisor (no padding pass)
        if hw % t == 0:
            return t, hw
        t -= 128
    return aligned, pl.cdiv(hw, aligned) * aligned


def nll_multilabel_smooth(x, target, *, smoothing=0.1, nclasses=6, max_hw_tile=65536):
    """x: (B, C, H, W) logits (NCHW, any float dtype); target: (B, H, W) int class ids."""
    confidence = 1.0 - smoothing
    B, C, H, W = x.shape
    assert C == nclasses
    HW = H * W
    P = B * HW

    # Free (contiguous) reshape — no transpose, keep the input dtype (no upcast in wrapper).
    x3 = x.reshape(B, C, HW)
    t3 = target.astype(jnp.int32).reshape(B, 1, HW)

    hw_tile, hw_pad = _choose_tile(HW, max_hw_tile)
    needs_mask = hw_pad != HW
    if needs_mask:
        x3 = jnp.pad(x3, ((0, 0), (0, 0), (0, hw_pad - HW)))
        t3 = jnp.pad(t3, ((0, 0), (0, 0), (0, hw_pad - HW)))
    num_j = hw_pad // hw_tile

    kernel = functools.partial(
        _nll_smooth_kernel,
        confidence=confidence,
        smoothing=smoothing,
        inv_nclasses=1.0 / nclasses,
        hw_valid=HW,
        hw_tile=hw_tile,
        needs_mask=needs_mask,
    )

    partials = pl.pallas_call(
        kernel,
        out_shape=jax.ShapeDtypeStruct((B * 8, num_j * 128), jnp.float32),
        grid_spec=pltpu.PrefetchScalarGridSpec(
            num_scalar_prefetch=0,
            grid=(B, num_j),
            in_specs=[
                # classes on sublanes, pixels on lanes; lane-dense full-width DMA
                pl.BlockSpec((1, C, hw_tile), lambda b, j: (b, 0, j)),
                # lane-dense labels (no degenerate 4-byte-row DMA)
                pl.BlockSpec((1, 1, hw_tile), lambda b, j: (b, 0, j)),
            ],
            # each grid step owns its own tile-aligned (8,128) partial-sum block
            out_specs=pl.BlockSpec((8, 128), lambda b, j: (b, j)),
        ),
        compiler_params=pltpu.CompilerParams(
            # fully parallel: no cross-step accumulation, so megacore TCs can split the grid
            dimension_semantics=("parallel", "parallel"),
            # normalize the scoped-VMEM budget across v5e/v6e/v7x (safe < physical on all)
            vmem_limit_bytes=32 << 20,
        ),
    )(x3, t3)

    return (jnp.sum(partials) / P).astype(jnp.float32)


def _reference(x, target, smoothing=0.1):
    """Pure-JAX reference of the PyTorch training forward."""
    confidence = 1.0 - smoothing
    x = x.astype(jnp.float32)
    logprobs = jax.nn.log_softmax(x, axis=1)                      # (B, C, H, W)
    onehot = jax.nn.one_hot(target, x.shape[1], axis=1)           # (B, C, H, W)
    nll = -jnp.sum(logprobs * onehot, axis=1)                     # (B, H, W)
    smooth = -jnp.mean(logprobs, axis=1)                          # (B, H, W)
    return jnp.mean(confidence * nll + smoothing * smooth)


if __name__ == "__main__":
    key = jax.random.PRNGKey(0)

    # main case: B=2, C=6, 16x16 (single full-axis pixel tile per image)
    B, C, H, W = 2, 6, 16, 16
    kx, kt, kx2, kt2 = jax.random.split(key, 4)
    x = jax.random.normal(kx, (B, C, H, W), dtype=jnp.float32)
    target = jax.random.randint(kt, (B, H, W), 0, C, dtype=jnp.int32)

    loss = nll_multilabel_smooth(x, target, smoothing=0.1, nclasses=C)
    loss = jax.block_until_ready(loss)
    ref = _reference(x, target, smoothing=0.1)
    assert jnp.allclose(loss, ref, atol=1e-5, rtol=1e-5), (loss, ref)

    # second case: non-128-divisible pixel axis with a tiny max tile to exercise the
    # padded / masked multi-block path
    B2, H2, W2 = 1, 3, 50
    x2 = jax.random.normal(kx2, (B2, C, H2, W2), dtype=jnp.float32)
    t2 = jax.random.randint(kt2, (B2, H2, W2), 0, C, dtype=jnp.int32)

    loss2 = nll_multilabel_smooth(x2, t2, smoothing=0.1, nclasses=C, max_hw_tile=128)
    loss2 = jax.block_until_ready(loss2)
    ref2 = _reference(x2, t2, smoothing=0.1)
    assert jnp.allclose(loss2, ref2, atol=1e-5, rtol=1e-5), (loss2, ref2)

    print("KERNEL_OK")
</pallas_src>

<mosaic_0001>
module attributes {stable_mosaic.version = 11 : i64} {
  func.func @_nll_smooth_kernel(%arg0: i32, %arg1: i32, %arg2: memref<1x6x256xf32, #tpu.memory_space<vmem>>, %arg3: memref<1x1x256xi32, #tpu.memory_space<vmem>>, %arg4: memref<8x128xf32, #tpu.memory_space<vmem>>) attributes {dimension_semantics = [#tpu.dimension_semantics<parallel>, #tpu.dimension_semantics<parallel>], iteration_bounds = array<i64: 2, 1>, scalar_prefetch = 0 : i64, scratch_operands = 0 : i64, tpu.core_type = #tpu.core_type<tc>, window_params = [{transform_indices = @transform_0, window_bounds = array<i64: 1, 6, 256>}, {transform_indices = @transform_1, window_bounds = array<i64: 1, 1, 256>}, {transform_indices = @transform_2, window_bounds = array<i64: 8, 128>}]} {
    %c0 = arith.constant 0 : index
    %c0_0 = arith.constant 0 : index
    %c0_1 = arith.constant 0 : index
    %0 = vector.load %arg2[%c0, %c0_0, %c0_1] : memref<1x6x256xf32, #tpu.memory_space<vmem>>, vector<1x6x256xf32>
    %1 = vector.shape_cast %0 : vector<1x6x256xf32> to vector<6x256xf32>
    %c0_2 = arith.constant 0 : index
    %c0_3 = arith.constant 0 : index
    %c0_4 = arith.constant 0 : index
    %2 = vector.load %arg3[%c0_2, %c0_3, %c0_4] : memref<1x1x256xi32, #tpu.memory_space<vmem>>, vector<1x1x256xi32>
    %3 = vector.shape_cast %2 : vector<1x1x256xi32> to vector<1x256xi32>
    %cst = arith.constant dense<0xFF800000> : vector<256xf32>
    %4 = vector.multi_reduction <maximumf>, %1, %cst [0] : vector<6x256xf32> to vector<256xf32>
    %5 = vector.shape_cast %4 : vector<256xf32> to vector<1x256xf32>
    %6 = vector.broadcast %5 : vector<1x256xf32> to vector<6x256xf32>
    %7 = arith.subf %1, %6 : vector<6x256xf32>
    %8 = math.exp %7 : vector<6x256xf32>
    %cst_5 = arith.constant dense<0.000000e+00> : vector<256xf32>
    %9 = vector.multi_reduction <add>, %8, %cst_5 [0] : vector<6x256xf32> to vector<256xf32>
    %10 = vector.shape_cast %9 : vector<256xf32> to vector<1x256xf32>
    %11 = math.log %10 : vector<1x256xf32>
    %12 = tpu.iota {dimensions = array<i32: 0>} : vector<6x256xi32>
    %13 = vector.broadcast %3 : vector<1x256xi32> to vector<6x256xi32>
    %14 = arith.cmpi eq, %12, %13 : vector<6x256xi32>
    %cst_6 = arith.constant 0.000000e+00 : f32
    %15 = vector.broadcast %cst_6 : f32 to vector<6x256xf32>
    %16 = arith.select %14, %1, %15 : vector<6x256xi1>, vector<6x256xf32>
    %cst_7 = arith.constant dense<0.000000e+00> : vector<256xf32>
    %17 = vector.multi_reduction <add>, %16, %cst_7 [0] : vector<6x256xf32> to vector<256xf32>
    %18 = vector.shape_cast %17 : vector<256xf32> to vector<1x256xf32>
    %cst_8 = arith.constant dense<0.000000e+00> : vector<256xf32>
    %19 = vector.multi_reduction <add>, %1, %cst_8 [0] : vector<6x256xf32> to vector<256xf32>
    %20 = vector.shape_cast %19 : vector<256xf32> to vector<1x256xf32>
    %cst_9 = arith.constant 0.166666672 : f32
    %21 = vector.broadcast %cst_9 : f32 to vector<1x256xf32>
    %22 = arith.mulf %20, %21 : vector<1x256xf32>
    %23 = arith.addf %5, %11 : vector<1x256xf32>
    %cst_10 = arith.constant 0.899999976 : f32
    %24 = vector.broadcast %cst_10 : f32 to vector<1x256xf32>
    %25 = arith.mulf %24, %18 : vector<1x256xf32>
    %26 = arith.subf %23, %25 : vector<1x256xf32>
    %cst_11 = arith.constant 1.000000e-01 : f32
    %27 = vector.broadcast %cst_11 : f32 to vector<1x256xf32>
    %28 = arith.mulf %27, %22 : vector<1x256xf32>
    %29 = arith.subf %26, %28 : vector<1x256xf32>
    %30 = vector.shape_cast %29 : vector<1x256xf32> to vector<1x1x256xf32>
    %cst_12 = arith.constant dense<0.000000e+00> : vector<1xf32>
    %31 = vector.multi_reduction <add>, %30, %cst_12 [1, 2] : vector<1x1x256xf32> to vector<1xf32>
    %32 = vector.shape_cast %31 : vector<1xf32> to vector<1x1x1xf32>
    %33 = vector.extract %32[0, 0, 0] : f32 from vector<1x1x1xf32>
    %34 = tpu.iota {dimensions = array<i32: 0>} : vector<8x128xi32>
    %35 = tpu.iota {dimensions = array<i32: 1>} : vector<8x128xi32>
    %c0_i32 = arith.constant 0 : i32
    %36 = vector.broadcast %c0_i32 : i32 to vector<8x128xi32>
    %37 = arith.cmpi eq, %34, %36 : vector<8x128xi32>
    %c0_i32_13 = arith.constant 0 : i32
    %38 = vector.broadcast %c0_i32_13 : i32 to vector<8x128xi32>
    %39 = arith.cmpi eq, %35, %38 : vector<8x128xi32>
    %40 = arith.andi %37, %39 : vector<8x128xi1>
    %cst_14 = arith.constant 0.000000e+00 : f32
    %41 = vector.broadcast %33 : f32 to vector<8x128xf32>
    %42 = vector.broadcast %cst_14 : f32 to vector<8x128xf32>
    %43 = arith.select %40, %41, %42 : vector<8x128xi1>, vector<8x128xf32>
    %c0_15 = arith.constant 0 : index
    %c0_16 = arith.constant 0 : index
    %44 = vector.load %arg4[%c0_15, %c0_16] : memref<8x128xf32, #tpu.memory_space<vmem>>, vector<8x128xf32>
    tpu.vector_store %arg4[%c0_15, %c0_16], %43 {strides = array<i32>} : memref<8x128xf32, #tpu.memory_space<vmem>>, vector<8x128xf32>,
    return
  }
  func.func @transform_0(%arg0: i32, %arg1: i32) -> (i32, i32, i32) {
    %c0_i32 = arith.constant 0 : i32
    %c0_i32_0 = arith.constant 0 : i32
    return %arg0, %c0_i32, %arg1 : i32, i32, i32
  }
  func.func @transform_1(%arg0: i32, %arg1: i32) -> (i32, i32, i32) {
    %c0_i32 = arith.constant 0 : i32
    %c0_i32_0 = arith.constant 0 : i32
    return %arg0, %c0_i32, %arg1 : i32, i32, i32
  }
  func.func @transform_2(%arg0: i32, %arg1: i32) -> (i32, i32) {
    %c0_i32 = arith.constant 0 : i32
    return %arg0, %arg1 : i32, i32
  }
}

</mosaic_0001>

<llo_original>
// kernel: tpu_custom_call.1
$region0: #{tpu_custom_call.1}
  #allocation0 [shape = 'u32[]', space=smem, size = 0x4, offset = 0x4, fixed_abs, tag = 'smem constant byte address 0x4 - core index']
  #allocation1 [shape = 'u32[144,128]{1,0:T(1,128)}', space=vmem, size = 0x12000, scoped, tag = 'internal scratch']
  %s0 = inlined_call_operand.vmem [shape: f32[2,6,256], index: 0, kind: input, shape index: {}]
  %s1 = inlined_call_operand.vmem [shape: s32[2,1,256], index: 1, kind: input, shape index: {}]
  %s2 = inlined_call_operand.hbm [shape: f32[16,128], index: 2, kind: output, shape index: {}]
  %s3 = sld [smem:[#allocation0]]
  $region41: #{tpu_custom_call.1} parent=0
    _
  %s5 = ssub.s32 1, %s3
  %s6 = scalar_select 0, %s5, %s3
  $region1: #{tpu_custom_call.1} parent=0
    #allocation2 [shape = 'u8[8192]{0}', space=vmem, size = 0x2000, scoped, tag = 'output window, operand 0']
    #allocation3 [shape = 's32[2]{0}', space=sflag, size = 0x8, scoped, tag = 'scoped memory for tpu_custom_call.1']
    %7 = vsyncpa [#allocation3], 0
    %s8 = scalar_lea.sflag [#allocation3], 1
    %9 = vsyncpa %s8, 0
    loop: start=0, step=1, limit=4
    $region2: #{tpu_custom_call.1} parent=1 // loop_pre_header
      _
    $region3: #{tpu_custom_call.1} parent=1 // loop_header
      %s11 = sphi 0, %s15
      %p12 = scmp.ge.s32.totalorder %s11, 4
      %s18 = sphi 0, %s30
      %s19 = sphi 0, %s26
      %s20 = sphi 0, %s18
      %s21 = sphi 0, %s19
      %s22 = sphi 0, %s20
      %s23 = sphi 0, %s21
      %s35 = sphi 0, %s37
      %s38 = sphi 0, %s35
      %s39 = sphi 0, %s38
      %s55 = sphi 0, %s39
      %s63 = sphi 0, %s65
      %s66 = sphi 0, %s63
      %s67 = sphi 0, %s66
      %s83 = sphi 0, %s67
      %s91 = sphi 0, %s93
      %s94 = sphi 0, %s91
      %s95 = sphi 0, %s94
      %s111 = sphi 0, %s95
    $region4: #{tpu_custom_call.1} parent=1 // loop_header_branch
      %14 = sbr.rel (%p12) target = $region8
    $region5: #{tpu_custom_call.1} parent=1 // loop_body
      %s16 = ssub.s32 %s11, 1
      %s17 = ssub.s32 %s11, 2
      %s24 = sadd.s32 1, %s19
      %p25 = scmp.ge.s32.totalorder %s24, 1
      %s26 = scalar_select %p25, 0, %s24
      %s27 = sadd.s32 1, %s18
      %s28 = scalar_select %p25, %s27, %s18
      %p29 = scmp.ge.s32.totalorder %s28, 2
      %s30 = scalar_select %p29, 0, %s28
      %s31 = ssub.s32 %s18, %s30
      %s32 = ssub.s32 %s19, %s26
      %s33 = sor.u32 %s31, %s32
      %p34 = scmp.eq.s32.totalorder %s33, 0
      %s36 = sadd.s32 %s35, 1
      %s37 = scalar_select %p34, %s35, %s36
      %p40 = pneg %p34
      %p41 = scmp.eq.s32.totalorder %s11, 1
      %p42 = por %p40, %p41
      %p43 = scmp.ne.s32.totalorder %s35, %s38
      %p44 = scmp.eq.s32.totalorder %s11, 0
      %p45 = por %p43, %p44
      %p46 = scmp.ne.s32.totalorder %s35, %s38
      %p47 = scmp.eq.s32.totalorder %s16, 1
      %p48 = por %p46, %p47
      %p49 = scmp.ne.s32.totalorder %s38, %s39
      %p50 = scmp.eq.s32.totalorder %s16, 0
      %p51 = por %p49, %p50
      %p52 = scmp.ne.s32.totalorder %s38, %s39
      %p53 = scmp.eq.s32.totalorder %s17, 1
      %p54 = por %p52, %p53
      %p56 = scmp.ne.s32.totalorder %s39, %s55
      %p57 = scmp.eq.s32.totalorder %s17, 0
      %p58 = por %p56, %p57
      %s59 = ssub.s32 %s18, %s30
      %s60 = ssub.s32 %s19, %s26
      %s61 = sor.u32 %s59, %s60
      %p62 = scmp.eq.s32.totalorder %s61, 0
      %s64 = sadd.s32 %s63, 1
      %s65 = scalar_select %p62, %s63, %s64
      %p68 = pneg %p62
      %p69 = scmp.eq.s32.totalorder %s11, 1
      %p70 = por %p68, %p69
      %p71 = scmp.ne.s32.totalorder %s63, %s66
      %p72 = scmp.eq.s32.totalorder %s11, 0
      %p73 = por %p71, %p72
      %p74 = scmp.ne.s32.totalorder %s63, %s66
      %p75 = scmp.eq.s32.totalorder %s16, 1
      %p76 = por %p74, %p75
      %p77 = scmp.ne.s32.totalorder %s66, %s67
      %p78 = scmp.eq.s32.totalorder %s16, 0
      %p79 = por %p77, %p78
      %p80 = scmp.ne.s32.totalorder %s66, %s67
      %p81 = scmp.eq.s32.totalorder %s17, 1
      %p82 = por %p80, %p81
      %p84 = scmp.ne.s32.totalorder %s67, %s83
      %p85 = scmp.eq.s32.totalorder %s17, 0
      %p86 = por %p84, %p85
      %s87 = ssub.s32 %s18, %s30
      %s88 = ssub.s32 %s19, %s26
      %s89 = sor.u32 %s87, %s88
      %p90 = scmp.eq.s32.totalorder %s89, 0
      %s92 = sadd.s32 %s91, 1
      %s93 = scalar_select %p90, %s91, %s92
      %p96 = pneg %p90
      %p97 = scmp.eq.s32.totalorder %s11, 1
      %p98 = por %p96, %p97
      %p99 = scmp.ne.s32.totalorder %s91, %s94
      %p100 = scmp.eq.s32.totalorder %s11, 0
      %p101 = por %p99, %p100
      %p102 = scmp.ne.s32.totalorder %s91, %s94
      %p103 = scmp.eq.s32.totalorder %s16, 1
      %p104 = por %p102, %p103
      %p105 = scmp.ne.s32.totalorder %s94, %s95
      %p106 = scmp.eq.s32.totalorder %s16, 0
      %p107 = por %p105, %p106
      %p108 = scmp.ne.s32.totalorder %s94, %s95
      %p109 = scmp.eq.s32.totalorder %s17, 1
      %p110 = por %p108, %p109
      %p112 = scmp.ne.s32.totalorder %s95, %s111
      %p113 = scmp.eq.s32.totalorder %s17, 0
      %p114 = por %p112, %p113
      %p115 = scmp.le.s32.totalorder 1, %s11
      %p116 = scmp.lt.s32.totalorder %s11, 3
      %p117 = pnand %p115, %p116
      %p118 = pneg %p117
      // Predicated region
      $region9: #{tpu_custom_call.1} parent=5 // pred_check
        _
      $region10: #{tpu_custom_call.1} parent=5 // pred_check_branch
        %120 = sbr.rel (%p117) target = $region12
      $region11: #{tpu_custom_call.1} parent=5 // pred_region
        %s121 = ssub.s32 %s11, 1
      $region12: #{tpu_custom_call.1} parent=5 // pred_fallthru
        _
      %p122 = scmp.lt.s32.totalorder %s11, 2
      // Predicated region
      $region13: #{tpu_custom_call.1} parent=5 // pred_check
        %p123 = pneg %p122
      $region14: #{tpu_custom_call.1} parent=5 // pred_check_branch
        %125 = sbr.rel (%p123) target = $region16
      $region15: #{tpu_custom_call.1} parent=5 // pred_region
        // Predicated region
        $region17: #{tpu_custom_call.1} parent=15 // pred_check
          %p126 = pneg %p45
        $region18: #{tpu_custom_call.1} parent=15 // pred_check_branch
          %128 = sbr.rel (%p126) target = $region20
        $region19: #{tpu_custom_call.1} parent=15 // pred_region
          %s129 = smul.u32 2, %s19
          %p130 = scmp.lt.s32.totalorder %s18, 1
          %s131 = scalar_select %p130, %s18, 1
          %p132 = scmp.lt.s32.totalorder %s129, 1
          %s133 = scalar_select %p132, %s129, 1
          %s134 = smul.addr %s131, 2
          %s135 = sadd.s32 %s133, %s134
          %s136 = smul.addr %s135, 8
          %s137 = scalar_lea.vmem %s0, %s136
          %s138 = smul.u32 2, %s19
        $region20: #{tpu_custom_call.1} parent=15 // pred_fallthru
          _
        // Predicated region
        $region21: #{tpu_custom_call.1} parent=15 // pred_check
          %p139 = pneg %p73
        $region22: #{tpu_custom_call.1} parent=15 // pred_check_branch
          %141 = sbr.rel (%p139) target = $region24
        $region23: #{tpu_custom_call.1} parent=15 // pred_region
          %s142 = smul.u32 2, %s19
          %p143 = scmp.lt.s32.totalorder %s18, 1
          %s144 = scalar_select %p143, %s18, 1
          %p145 = scmp.lt.s32.totalorder %s142, 1
          %s146 = scalar_select %p145, %s142, 1
          %s147 = smul.addr %s144, 2
          %s148 = sadd.s32 %s146, %s147
          %s149 = scalar_lea.vmem %s1, %s148
          %s150 = smul.u32 2, %s19
        $region24: #{tpu_custom_call.1} parent=15 // pred_fallthru
          _
      $region16: #{tpu_custom_call.1} parent=5 // pred_fallthru
        _
      %p151 = scmp.le.s32.totalorder 1, %s11
      %p152 = scmp.lt.s32.totalorder %s11, 3
      %p153 = pnand %p151, %p152
      %p154 = pneg %p153
      // Predicated region
      $region25: #{tpu_custom_call.1} parent=5 // pred_check
        _
      $region26: #{tpu_custom_call.1} parent=5 // pred_check_branch
        %156 = sbr.rel (%p153) target = $region28
      $region27: #{tpu_custom_call.1} parent=5 // pred_region
        %s157 = ssub.s32 %s11, 1
        %s158 = smul.u32 2, %s21
        %p159 = scmp.lt.s32.totalorder %s20, 1
        %s160 = scalar_select %p159, %s20, 1
        %p161 = scmp.lt.s32.totalorder %s158, 1
        %s162 = scalar_select %p161, %s158, 1
        %s163 = smul.addr %s160, 2
        %s164 = sadd.s32 %s162, %s163
        %s165 = smul.addr %s164, 8
        %s166 = scalar_lea.vmem %s0, %s165
        %p167 = pneg %p51
        %p168 = pneg %p48
        %s169 = smul.u32 2, %s21
        %p170 = scmp.lt.s32.totalorder %s20, 1
        %s171 = scalar_select %p170, %s20, 1
        %p172 = scmp.lt.s32.totalorder %s169, 1
        %s173 = scalar_select %p172, %s169, 1
        %s174 = smul.addr %s171, 2
        %s175 = sadd.s32 %s173, %s174
        %s176 = scalar_lea.vmem %s1, %s175
        %p177 = pneg %p79
        %p178 = pneg %p76
        %p179 = pneg %p107
        %p180 = pneg %p104
        %s181 = sand.u32 %s94, 1
        %s182 = scalar_lea.sflag [#allocation3], %s181
        %s183 = sand.u32 %s94, 1
        %s184 = smul.addr %s183, 8
        %s185 = scalar_lea.vmem [#allocation2], %s184
        %s186 = smul.u32 2, %s21
        %p187 = scmp.lt.s32.totalorder %s20, 1
        %s188 = scalar_select %p187, %s20, 1
        %p189 = scmp.lt.s32.totalorder %s186, 1
        %s190 = scalar_select %p189, %s186, 1
        %s191 = smul.addr %s188, 2
        %s192 = sadd.s32 %s190, %s191
        %s193 = smul.addr %s192, 8
        %s194 = scalar_lea.vmem %s0, %s193
        %s195 = smul.u32 2, %s21
        %s196 = smul.u32 2, %s21
        %p197 = scmp.lt.s32.totalorder %s20, 1
        %s198 = scalar_select %p197, %s20, 1
        %p199 = scmp.lt.s32.totalorder %s196, 1
        %s200 = scalar_select %p199, %s196, 1
        %s201 = smul.addr %s198, 2
        %s202 = sadd.s32 %s200, %s201
        %s203 = scalar_lea.vmem %s1, %s202
        %s204 = smul.u32 2, %s21
        %v205 = vld [vmem:[%s194] sm:$0x3f]
        %v206 = vld [vmem:[%s194 + $0x8] sm:$0x3f]
        %v207 = vld [vmem:[%s203] sm:$0x3]
        %vm208 = vcmask 1045504
        %v209 = vsel %vm208, %v205, -inf
        %v210 = vrot.slane %v209, 4
        %v211 = vmax.f32 %v209, %v210
        %v212 = vrot.slane %v211, 2
        %v213 = vmax.f32 %v211, %v212
        %v214 = vrot.slane %v213, 1
        %v215 = vmax.f32 %v213, %v214
        %v216 = vsel %vm208, %v206, -inf
        %v217 = vrot.slane %v216, 4
        %v218 = vmax.f32 %v216, %v217
        %v219 = vrot.slane %v218, 2
        %v220 = vmax.f32 %v218, %v219
        %v221 = vrot.slane %v220, 1
        %v222 = vmax.f32 %v220, %v221
        %v223 = vsub.f32 %v205, %v215
        %v224 = vsub.f32 %v206, %v222
        %v225 = vmul.f32 %v223, 1.442695
        %v226 = vpow.pop %v225
        %v227 = vmul.f32 %v224, 1.442695
        %v228 = vpow.pop %v227
        %v229 = vsel %vm208, %v226, 0.0
        %v230 = vrot.slane %v229, 4
        %v231 = vadd.f32 %v229, %v230
        %v232 = vrot.slane %v231, 2
        %v233 = vadd.f32 %v231, %v232
        %v234 = vrot.slane %v233, 1
        %v235 = vadd.f32 %v233, %v234
        %v236 = vsel %vm208, %v228, 0.0
        %v237 = vrot.slane %v236, 4
        %v238 = vadd.f32 %v236, %v237
        %v239 = vrot.slane %v238, 2
        %v240 = vadd.f32 %v238, %v239
        %v241 = vrot.slane %v240, 1
        %v242 = vadd.f32 %v240, %v241
        %v243 = vlog2.pop %v235
        %v244 = vmul.f32 %v243, 0.6931472
        %v245 = vlog2.pop %v242
        %v246 = vmul.f32 %v245, 0.6931472
        %v247 = vlaneseq
        %v248 = vshrl.u32 %v247, 7
        %v249 = vlaneseq
        %v250 = vshrl.u32 %v249, 7
        %v251 = vsub.s32 0, %v250
        %v252 = vrot.slane %v207, %v251
        %v253 = vlaneseq
        %v254 = vshrl.u32 %v253, 7
        %v255 = vsub.s32 1, %v254
        %v256 = vrot.slane %v207, %v255
        %vm257 = vcmp.eq.s32.totalorder %v248, %v252
        %vm258 = vcmp.eq.s32.totalorder %v248, %v256
        %v259 = vsel %vm257, %v205, 0.0
        %v260 = vsel %vm258, %v206, 0.0
        %v261 = vsel %vm208, %v259, 0.0
        %v262 = vrot.slane %v261, 4
        %v263 = vadd.f32 %v261, %v262
        %v264 = vrot.slane %v263, 2
        %v265 = vadd.f32 %v263, %v264
        %v266 = vrot.slane %v265, 1
        %v267 = vadd.f32 %v265, %v266
        %v268 = vsel %vm208, %v260, 0.0
        %v269 = vrot.slane %v268, 4
        %v270 = vadd.f32 %v268, %v269
        %v271 = vrot.slane %v270, 2
        %v272 = vadd.f32 %v270, %v271
        %v273 = vrot.slane %v272, 1
        %v274 = vadd.f32 %v272, %v273
        %v275 = vsel %vm208, %v205, 0.0
        %v276 = vrot.slane %v275, 4
        %v277 = vadd.f32 %v275, %v276
        %v278 = vrot.slane %v277, 2
        %v279 = vadd.f32 %v277, %v278
        %v280 = vrot.slane %v279, 1
        %v281 = vadd.f32 %v279, %v280
        %v282 = vsel %vm208, %v206, 0.0
        %v283 = vrot.slane %v282, 4
        %v284 = vadd.f32 %v282, %v283
        %v285 = vrot.slane %v284, 2
        %v286 = vadd.f32 %v284, %v285
        %v287 = vrot.slane %v286, 1
        %v288 = vadd.f32 %v286, %v287
        %v289 = vmul.f32 %v281, 0.16666667
        %v290 = vmul.f32 %v288, 0.16666667
        %v291 = vadd.f32 %v215, %v244
        %v292 = vadd.f32 %v222, %v246
        %v293 = vmul.f32 %v267, 0.9
        %v294 = vmul.f32 %v274, 0.9
        %v295 = vsub.f32 %v291, %v293
        %v296 = vsub.f32 %v292, %v294
        %v297 = vmul.f32 %v289, 0.1
        %v298 = vmul.f32 %v290, 0.1
        %v299 = vsub.f32 %v295, %v297
        %v300 = vsub.f32 %v296, %v298
        %vm301 = vcmask 1040384
        %v302 = vsel %vm301, %v299, 0.0
        %v303 = vsel %vm301, %v300, 0.0
        %v304 = vadd.f32 %v302, %v303
        %305 = vadd.xlane.f32.xlu0 %v304
        %v306 = vpop.xlane.xlu0 %305
        %v307 = vrot.slane %v306, 4
        %v308 = vadd.f32 %v306, %v307
        %v309 = vrot.slane %v308, 2
        %v310 = vadd.f32 %v308, %v309
        %v311 = vrot.slane %v310, 1
        %v312 = vadd.f32 %v310, %v311
        %s313 = vtos %v312
        %v314 = vlaneseq
        %v315 = vand.u32 %v314, 127
        %vm316 = vcmp.eq.s32.totalorder %v248, 0
        %vm317 = vcmp.eq.s32.totalorder %v315, 0
        %vm318 = vmand %vm316, %vm317
        %v319 = vstv %s313
        %v320 = vsel %vm318, %v319, 0.0
        %321 = vst [vmem:[%s185] sm:$0xff] %v320
        %s322 = sand.u32 %s94, 1
        %s323 = scalar_lea.sflag [#allocation3], %s322
        %s324 = sand.u32 %s94, 1
        %s325 = smul.addr %s324, 8
        %s326 = scalar_lea.vmem [#allocation2], %s325
        // Predicated region
        $region29: #{tpu_custom_call.1} parent=27 // pred_check
          %p327 = pneg %p104
        $region30: #{tpu_custom_call.1} parent=27 // pred_check_branch
          %329 = sbr.rel (%p327) target = $region32
        $region31: #{tpu_custom_call.1} parent=27 // pred_region
          %s331 = ssub.s32 128, 128
          %332 = vsyncadd %s323, %s331
          %s333 = sadd.s32 %s21, %s20
          %s334 = smul.addr %s333, 128
          %s335 = scalar_lea.hbm %s2, %s334
          %s337 = sshll.u32 %s326, 4
          %s338 = int_to_ptr.vmem [resolvable:$true] %s337
          %340 = dma.vmem_to_hbm [thread:$0]  %s338, 128, %s335, %s323
        $region32: #{tpu_custom_call.1} parent=27 // pred_fallthru
          _
      $region28: #{tpu_custom_call.1} parent=5 // pred_fallthru
        _
      %p341 = scmp.le.s32.totalorder 2, %s11
      // Predicated region
      $region33: #{tpu_custom_call.1} parent=5 // pred_check
        %p342 = pneg %p341
      $region34: #{tpu_custom_call.1} parent=5 // pred_check_branch
        %344 = sbr.rel (%p342) target = $region36
      $region35: #{tpu_custom_call.1} parent=5 // pred_region
        %s345 = ssub.s32 %s11, 2
        // Predicated region
        $region37: #{tpu_custom_call.1} parent=35 // pred_check
          %p346 = pneg %p110
        $region38: #{tpu_custom_call.1} parent=35 // pred_check_branch
          %348 = sbr.rel (%p346) target = $region40
        $region39: #{tpu_custom_call.1} parent=35 // pred_region
          %s349 = sand.u32 %s95, 1
          %s350 = scalar_lea.sflag [#allocation3], %s349
          %s351 = sand.u32 %s95, 1
          %s352 = smul.addr %s351, 8
          %s353 = scalar_lea.vmem [#allocation2], %s352
          %354 = dma.done %s350, 128
        $region40: #{tpu_custom_call.1} parent=35 // pred_fallthru
          _
      $region36: #{tpu_custom_call.1} parent=5 // pred_fallthru
        _
    $region6: #{tpu_custom_call.1} parent=1 // loop_footer
      %s15 = sadd.s32 1, %s11
    $region7: #{tpu_custom_call.1} parent=1 // loop_footer_branch
      %10 = sbr.rel target = $region3
    $region8: #{tpu_custom_call.1} parent=1 // loop_exit
      _
    %355 = vsyncpa [#allocation3], 1
    %s356 = scalar_lea.sflag [#allocation3], 1
    %357 = vsyncpa %s356, 1

</llo_original>
